<compile_context>
chip_gen: v7x
topology: tpu7x:2x2x1
jax: 0.10.0
libtpu: 0.0.40
codegen_flags: <defaults>
</compile_context>

<pallas_src>
import functools

import numpy as np
import jax
import jax.numpy as jnp
from jax.experimental import pallas as pl
from jax.experimental.pallas import tpu as pltpu


def _round_up(x, m):
    return ((x + m - 1) // m) * m


# ----------------------------------------------------------------------------
# Kernel
# ----------------------------------------------------------------------------
def _policy_mlp_kernel(act_dim, min_log_std, max_log_std, *refs):
    """obs -> MLP -> logits (TB, 2*act_dim); out = [mean | exp(clamp(log_std))].

    refs = (obs_ref, w0, b0, w1, b1, ..., out_ref); weights are (in, out)."""
    obs_ref, out_ref = refs[0], refs[-1]
    wb_refs = refs[1:-1]
    n_layers = len(wb_refs) // 2

    h = obs_ref[...]
    for j in range(n_layers):
        w = wb_refs[2 * j][...]
        b = wb_refs[2 * j + 1][...]
        h = jnp.dot(h, w, preferred_element_type=jnp.float32) + b
        if j < n_layers - 1:
            h = jnp.maximum(h, 0.0)          # hidden_activation = relu

    # Head: first act_dim lanes are the mean (identity output activation), the
    # remaining lanes are exp(clamp(log_std)).  Lane-mask select so the whole
    # (TB, 2*act_dim) block is produced by a single store.
    lane = jax.lax.broadcasted_iota(jnp.int32, h.shape, 1)
    std = jnp.exp(jnp.clip(h, min_log_std, max_log_std))
    out_ref[...] = jnp.where(lane < act_dim, h, std).astype(out_ref.dtype)


# ----------------------------------------------------------------------------
# Wrapper: pallas_call plumbing
# ----------------------------------------------------------------------------
def _run_policy_kernel(obs, wb, act_dim, min_log_std, max_log_std, tile_b):
    obs = obs.astype(jnp.float32)
    B, obs_dim = obs.shape
    out_dim = wb[-1][0].shape[1]            # == 2 * act_dim

    # Batch tile: as big as possible (amortizes per-grid-step overhead), but
    # keep at least two grid steps when the batch allows it so the "parallel"
    # batch axis can shard across v7x's two TensorCores.
    half_batch = _round_up(max(1, (B + 1) // 2), 8)
    tb = min(max(8, (tile_b // 8) * 8), half_batch)
    b_pad = _round_up(B, tb)
    if b_pad != B:
        obs = jnp.pad(obs, ((0, b_pad - B), (0, 0)))
    grid = (b_pad // tb,)

    flat_params = []
    in_specs = [pl.BlockSpec((tb, obs_dim), lambda i: (i, 0))]     # streamed
    for w, b in wb:
        flat_params += [w.astype(jnp.float32), b.astype(jnp.float32)]
        in_specs += [pl.BlockSpec(w.shape, lambda i: (0, 0)),      # resident
                     pl.BlockSpec(b.shape, lambda i: (0, 0))]      # resident

    kernel = functools.partial(
        _policy_mlp_kernel, act_dim, float(min_log_std), float(max_log_std))

    out = pl.pallas_call(
        kernel,
        out_shape=jax.ShapeDtypeStruct((b_pad, out_dim), jnp.float32),
        grid_spec=pltpu.PrefetchScalarGridSpec(
            num_scalar_prefetch=0,
            grid=grid,
            in_specs=in_specs,
            out_specs=pl.BlockSpec((tb, out_dim), lambda i: (i, 0)),
        ),
        compiler_params=pltpu.CompilerParams(
            dimension_semantics=("parallel",)),
    )(obs, *flat_params)

    return out[:B] if b_pad != B else out


# ----------------------------------------------------------------------------
# std_type -> single equivalent MLP (assembled from tiny weight arrays)
# ----------------------------------------------------------------------------
def _merge_separated(mean_wb, std_wb):
    """Fuse the two towers of 'mlp_separated' into one MLP with output columns
    [mean | log_std]: layer 0 column-concat (shared input), deeper layers
    block-diagonal so the towers stay independent."""
    merged = []
    for j, ((mw, mb), (sw, sb)) in enumerate(zip(mean_wb, std_wb)):
        if j == 0:
            w = jnp.concatenate([mw, sw], axis=1)
        else:
            top = jnp.concatenate(
                [mw, jnp.zeros((mw.shape[0], sw.shape[1]), mw.dtype)], axis=1)
            bot = jnp.concatenate(
                [jnp.zeros((sw.shape[0], mw.shape[1]), sw.dtype), sw], axis=1)
            w = jnp.concatenate([top, bot], axis=0)
        b = jnp.concatenate([mb, sb], axis=1)
        merged.append((w, b))
    return merged


def _merge_parameter(mean_wb, log_std_param, act_dim):
    """Append act_dim zero-weight output columns whose bias is log_std."""
    merged = list(mean_wb[:-1])
    w_last, b_last = mean_wb[-1]
    w = jnp.concatenate(
        [w_last, jnp.zeros((w_last.shape[0], act_dim), w_last.dtype)], axis=1)
    b = jnp.concatenate(
        [b_last, jnp.reshape(log_std_param, (1, act_dim)).astype(b_last.dtype)],
        axis=1)
    merged.append((w, b))
    return merged


def stocha_policy_forward(obs, params, *, std_type, act_dim,
                          min_log_std, max_log_std, tile_b=1024):
    """Pallas implementation of StochaPolicy.forward(obs).

    Returns concat([action_mean, action_std], -1) of shape (B, 2*act_dim)."""
    if std_type == "mlp_shared":
        wb = list(params["policy"])
    elif std_type == "mlp_separated":
        wb = _merge_separated(params["mean"], params["log_std"])
    elif std_type == "parameter":
        wb = _merge_parameter(params["mean"], params["log_std"], act_dim)
    else:
        raise NotImplementedError(std_type)
    return _run_policy_kernel(obs, wb, act_dim, min_log_std, max_log_std, tile_b)


# ----------------------------------------------------------------------------
# Params init + pure-JAX reference (original, un-merged semantics)
# ----------------------------------------------------------------------------
def init_mlp_params(key, sizes):
    """PyTorch-nn.Linear-style init; weights stored as (in, out)."""
    params = []
    for j in range(len(sizes) - 1):
        fan_in, fan_out = sizes[j], sizes[j + 1]
        key, kw, kb = jax.random.split(key, 3)
        bound = 1.0 / np.sqrt(fan_in)
        w = jax.random.uniform(kw, (fan_in, fan_out), jnp.float32, -bound, bound)
        b = jax.random.uniform(kb, (1, fan_out), jnp.float32, -bound, bound)
        params.append((w, b))
    return params


def _ref_mlp(x, wb):
    n = len(wb)
    for j, (w, b) in enumerate(wb):
        x = x @ w + b
        if j < n - 1:
            x = jnp.maximum(x, 0.0)
    return x


def reference_forward(obs, params, *, std_type, act_dim, min_log_std, max_log_std):
    obs = obs.astype(jnp.float32)
    if std_type == "mlp_shared":
        logits = _ref_mlp(obs, params["policy"])
        mean, log_std = logits[:, :act_dim], logits[:, act_dim:]
    elif std_type == "mlp_separated":
        mean = _ref_mlp(obs, params["mean"])
        log_std = _ref_mlp(obs, params["log_std"])
    elif std_type == "parameter":
        mean = _ref_mlp(obs, params["mean"])
        log_std = jnp.broadcast_to(
            jnp.reshape(params["log_std"], (1, act_dim)), mean.shape)
    else:
        raise NotImplementedError(std_type)
    std = jnp.exp(jnp.clip(log_std, min_log_std, max_log_std))
    return jnp.concatenate([mean, std], axis=-1)


# ----------------------------------------------------------------------------
if __name__ == "__main__":
    obs_dim, act_dim = 8, 4
    hidden_sizes = (32, 32)
    batch = 16
    min_log_std, max_log_std = -20.0, 2.0

    key = jax.random.PRNGKey(0)
    k_obs, k_obs2, k_shared, k_mean, k_std, k_mean2 = jax.random.split(key, 6)

    obs = jax.random.normal(k_obs, (batch, obs_dim), jnp.float32)

    tower_sizes = [obs_dim] + list(hidden_sizes) + [act_dim]
    shared_sizes = [obs_dim] + list(hidden_sizes) + [2 * act_dim]

    all_params = {
        "mlp_shared": {"policy": init_mlp_params(k_shared, shared_sizes)},
        "mlp_separated": {"mean": init_mlp_params(k_mean, tower_sizes),
                          "log_std": init_mlp_params(k_std, tower_sizes)},
        "parameter": {"mean": init_mlp_params(k_mean2, tower_sizes),
                      "log_std": -0.5 * jnp.ones((1, act_dim), jnp.float32)},
    }

    for std_type, params in all_params.items():
        out = stocha_policy_forward(
            obs, params, std_type=std_type, act_dim=act_dim,
            min_log_std=min_log_std, max_log_std=max_log_std)
        out = jax.block_until_ready(out)
        ref = reference_forward(
            obs, params, std_type=std_type, act_dim=act_dim,
            min_log_std=min_log_std, max_log_std=max_log_std)
        np.testing.assert_allclose(np.asarray(out), np.asarray(ref),
                                   rtol=1e-4, atol=1e-4)
        assert out.shape == (batch, 2 * act_dim)

    # Ragged batch: exercises wrapper padding + a multi-step "parallel" grid.
    obs_ragged = jax.random.normal(k_obs2, (100, obs_dim), jnp.float32)
    params = all_params["mlp_shared"]
    out = jax.block_until_ready(stocha_policy_forward(
        obs_ragged, params, std_type="mlp_shared", act_dim=act_dim,
        min_log_std=min_log_std, max_log_std=max_log_std))
    ref = reference_forward(
        obs_ragged, params, std_type="mlp_shared", act_dim=act_dim,
        min_log_std=min_log_std, max_log_std=max_log_std)
    np.testing.assert_allclose(np.asarray(out), np.asarray(ref),
                               rtol=1e-4, atol=1e-4)
    assert out.shape == (100, 2 * act_dim)

    print("KERNEL_OK")
</pallas_src>

<mosaic_0001>
module attributes {stable_mosaic.version = 11 : i64} {
  func.func @_policy_mlp_kernel(%arg0: i32, %arg1: memref<8x8xf32, #tpu.memory_space<vmem>>, %arg2: memref<8x32xf32, #tpu.memory_space<vmem>>, %arg3: memref<1x32xf32, #tpu.memory_space<vmem>>, %arg4: memref<32x32xf32, #tpu.memory_space<vmem>>, %arg5: memref<1x32xf32, #tpu.memory_space<vmem>>, %arg6: memref<32x8xf32, #tpu.memory_space<vmem>>, %arg7: memref<1x8xf32, #tpu.memory_space<vmem>>, %arg8: memref<8x8xf32, #tpu.memory_space<vmem>>) attributes {dimension_semantics = [#tpu.dimension_semantics<parallel>], iteration_bounds = array<i64: 2>, scalar_prefetch = 0 : i64, scratch_operands = 0 : i64, tpu.core_type = #tpu.core_type<tc>, window_params = [{transform_indices = @transform_0, window_bounds = array<i64: 8, 8>}, {pipeline_mode = #tpu.pipeline_mode<synchronous>, transform_indices = @transform_1, window_bounds = array<i64: 8, 32>}, {pipeline_mode = #tpu.pipeline_mode<synchronous>, transform_indices = @transform_2, window_bounds = array<i64: 1, 32>}, {pipeline_mode = #tpu.pipeline_mode<synchronous>, transform_indices = @transform_3, window_bounds = array<i64: 32, 32>}, {pipeline_mode = #tpu.pipeline_mode<synchronous>, transform_indices = @transform_4, window_bounds = array<i64: 1, 32>}, {pipeline_mode = #tpu.pipeline_mode<synchronous>, transform_indices = @transform_5, window_bounds = array<i64: 32, 8>}, {pipeline_mode = #tpu.pipeline_mode<synchronous>, transform_indices = @transform_6, window_bounds = array<i64: 1, 8>}, {transform_indices = @transform_7, window_bounds = array<i64: 8, 8>}]} {
    %c0 = arith.constant 0 : index
    %c0_0 = arith.constant 0 : index
    %0 = vector.load %arg1[%c0, %c0_0] : memref<8x8xf32, #tpu.memory_space<vmem>>, vector<8x8xf32>
    %c0_1 = arith.constant 0 : index
    %c0_2 = arith.constant 0 : index
    %1 = vector.load %arg2[%c0_1, %c0_2] : memref<8x32xf32, #tpu.memory_space<vmem>>, vector<8x32xf32>
    %c0_3 = arith.constant 0 : index
    %c0_4 = arith.constant 0 : index
    %2 = vector.load %arg3[%c0_3, %c0_4] : memref<1x32xf32, #tpu.memory_space<vmem>>, vector<1x32xf32>
    %cst = arith.constant dense<0.000000e+00> : vector<8x32xf32>
    %3 = tpu.matmul %0, %1, %cst {dimension_numbers = #tpu.dot_dimension_numbers<[1], [0], [0], [1], [0, 0, 1, 1], [], []>} : vector<8x8xf32>, vector<8x32xf32>, vector<8x32xf32> -> vector<8x32xf32>
    %4 = vector.broadcast %2 : vector<1x32xf32> to vector<8x32xf32>
    %5 = arith.addf %3, %4 : vector<8x32xf32>
    %cst_5 = arith.constant 0.000000e+00 : f32
    %6 = vector.broadcast %cst_5 : f32 to vector<8x32xf32>
    %7 = arith.maximumf %5, %6 : vector<8x32xf32>
    %c0_6 = arith.constant 0 : index
    %c0_7 = arith.constant 0 : index
    %8 = vector.load %arg4[%c0_6, %c0_7] : memref<32x32xf32, #tpu.memory_space<vmem>>, vector<32x32xf32>
    %c0_8 = arith.constant 0 : index
    %c0_9 = arith.constant 0 : index
    %9 = vector.load %arg5[%c0_8, %c0_9] : memref<1x32xf32, #tpu.memory_space<vmem>>, vector<1x32xf32>
    %cst_10 = arith.constant dense<0.000000e+00> : vector<8x32xf32>
    %10 = tpu.matmul %7, %8, %cst_10 {dimension_numbers = #tpu.dot_dimension_numbers<[1], [0], [0], [1], [0, 0, 1, 1], [], []>} : vector<8x32xf32>, vector<32x32xf32>, vector<8x32xf32> -> vector<8x32xf32>
    %11 = vector.broadcast %9 : vector<1x32xf32> to vector<8x32xf32>
    %12 = arith.addf %10, %11 : vector<8x32xf32>
    %cst_11 = arith.constant 0.000000e+00 : f32
    %13 = vector.broadcast %cst_11 : f32 to vector<8x32xf32>
    %14 = arith.maximumf %12, %13 : vector<8x32xf32>
    %c0_12 = arith.constant 0 : index
    %c0_13 = arith.constant 0 : index
    %15 = vector.load %arg6[%c0_12, %c0_13] : memref<32x8xf32, #tpu.memory_space<vmem>>, vector<32x8xf32>
    %c0_14 = arith.constant 0 : index
    %c0_15 = arith.constant 0 : index
    %16 = vector.load %arg7[%c0_14, %c0_15] : memref<1x8xf32, #tpu.memory_space<vmem>>, vector<1x8xf32>
    %cst_16 = arith.constant dense<0.000000e+00> : vector<8x8xf32>
    %17 = tpu.matmul %14, %15, %cst_16 {dimension_numbers = #tpu.dot_dimension_numbers<[1], [0], [0], [1], [0, 0, 1, 1], [], []>} : vector<8x32xf32>, vector<32x8xf32>, vector<8x8xf32> -> vector<8x8xf32>
    %18 = vector.broadcast %16 : vector<1x8xf32> to vector<8x8xf32>
    %19 = arith.addf %17, %18 : vector<8x8xf32>
    %20 = tpu.iota {dimensions = array<i32: 1>} : vector<8x8xi32>
    %cst_17 = arith.constant -2.000000e+01 : f32
    %cst_18 = arith.constant 2.000000e+00 : f32
    %21 = vector.broadcast %cst_17 : f32 to vector<8x8xf32>
    %22 = arith.maximumf %21, %19 : vector<8x8xf32>
    %23 = vector.broadcast %cst_18 : f32 to vector<8x8xf32>
    %24 = arith.minimumf %23, %22 : vector<8x8xf32>
    %25 = math.exp %24 : vector<8x8xf32>
    %c4_i32 = arith.constant 4 : i32
    %26 = vector.broadcast %c4_i32 : i32 to vector<8x8xi32>
    %27 = arith.cmpi slt, %20, %26 : vector<8x8xi32>
    %28 = arith.select %27, %19, %25 : vector<8x8xi1>, vector<8x8xf32>
    %c0_19 = arith.constant 0 : index
    %c0_20 = arith.constant 0 : index
    %29 = vector.load %arg8[%c0_19, %c0_20] : memref<8x8xf32, #tpu.memory_space<vmem>>, vector<8x8xf32>
    tpu.vector_store %arg8[%c0_19, %c0_20], %28 {strides = array<i32>} : memref<8x8xf32, #tpu.memory_space<vmem>>, vector<8x8xf32>,
    return
  }
  func.func @transform_0(%arg0: i32) -> (i32, i32) {
    %c0_i32 = arith.constant 0 : i32
    %c0_i32_0 = arith.constant 0 : i32
    return %arg0, %c0_i32 : i32, i32
  }
  func.func @transform_1(%arg0: i32) -> (i32, i32) {
    %c0_i32 = arith.constant 0 : i32
    %c0_i32_0 = arith.constant 0 : i32
    %c0_i32_1 = arith.constant 0 : i32
    return %c0_i32, %c0_i32_0 : i32, i32
  }
  func.func @transform_2(%arg0: i32) -> (i32, i32) {
    %c0_i32 = arith.constant 0 : i32
    %c0_i32_0 = arith.constant 0 : i32
    %c0_i32_1 = arith.constant 0 : i32
    return %c0_i32, %c0_i32_0 : i32, i32
  }
  func.func @transform_3(%arg0: i32) -> (i32, i32) {
    %c0_i32 = arith.constant 0 : i32
    %c0_i32_0 = arith.constant 0 : i32
    %c0_i32_1 = arith.constant 0 : i32
    return %c0_i32, %c0_i32_0 : i32, i32
  }
  func.func @transform_4(%arg0: i32) -> (i32, i32) {
    %c0_i32 = arith.constant 0 : i32
    %c0_i32_0 = arith.constant 0 : i32
    %c0_i32_1 = arith.constant 0 : i32
    return %c0_i32, %c0_i32_0 : i32, i32
  }
  func.func @transform_5(%arg0: i32) -> (i32, i32) {
    %c0_i32 = arith.constant 0 : i32
    %c0_i32_0 = arith.constant 0 : i32
    %c0_i32_1 = arith.constant 0 : i32
    return %c0_i32, %c0_i32_0 : i32, i32
  }
  func.func @transform_6(%arg0: i32) -> (i32, i32) {
    %c0_i32 = arith.constant 0 : i32
    %c0_i32_0 = arith.constant 0 : i32
    %c0_i32_1 = arith.constant 0 : i32
    return %c0_i32, %c0_i32_0 : i32, i32
  }
  func.func @transform_7(%arg0: i32) -> (i32, i32) {
    %c0_i32 = arith.constant 0 : i32
    %c0_i32_0 = arith.constant 0 : i32
    return %arg0, %c0_i32 : i32, i32
  }
}

</mosaic_0001>

<llo_original>
// kernel: tpu_custom_call.1
$region0: #{tpu_custom_call.1}
  #allocation0 [shape = 'u32[]', space=smem, size = 0x4, offset = 0x4, fixed_abs, tag = 'smem constant byte address 0x4 - core index']
  #allocation1 [shape = 'u32[144,128]{1,0:T(1,128)}', space=vmem, size = 0x12000, scoped, tag = 'internal scratch']
  %s0 = inlined_call_operand.vmem [shape: f32[16,8], index: 0, kind: input, shape index: {}]
  %s1 = inlined_call_operand.vmem [shape: f32[8,32], index: 1, kind: input, shape index: {}]
  %s2 = inlined_call_operand.vmem [shape: f32[1,32], index: 2, kind: input, shape index: {}]
  %s3 = inlined_call_operand.vmem [shape: f32[32,32], index: 3, kind: input, shape index: {}]
  %s4 = inlined_call_operand.vmem [shape: f32[1,32], index: 4, kind: input, shape index: {}]
  %s5 = inlined_call_operand.vmem [shape: f32[32,8], index: 5, kind: input, shape index: {}]
  %s6 = inlined_call_operand.vmem [shape: f32[1,8], index: 6, kind: input, shape index: {}]
  %s7 = inlined_call_operand.vmem [shape: f32[16,8], index: 7, kind: output, shape index: {}]
  %s8 = sld [smem:[#allocation0]]
  $region61: #{tpu_custom_call.1} parent=0
    _
  %s10 = ssub.s32 1, %s8
  %s11 = scalar_select 0, %s10, %s8
  loop: start=0, step=1, limit=4
  $region2: #{tpu_custom_call.1} parent=0 // loop_pre_header
    _
  $region3: #{tpu_custom_call.1} parent=0 // loop_header
    %s13 = sphi 0, %s17
    %p14 = scmp.ge.s32.totalorder %s13, 4
    %s23 = sphi 0, %s25
    %s26 = sphi 0, %s23
    %s27 = sphi 0, %s26
    %s43 = sphi 0, %s27
    %s47 = sphi 0, %s47
    %s49 = sphi 0, %s47
    %s50 = sphi 0, %s49
    %s64 = sphi 0, %s50
    %s68 = sphi 0, %s68
    %s70 = sphi 0, %s68
    %s71 = sphi 0, %s70
    %s85 = sphi 0, %s71
    %s89 = sphi 0, %s89
    %s91 = sphi 0, %s89
    %s92 = sphi 0, %s91
    %s106 = sphi 0, %s92
    %s110 = sphi 0, %s110
    %s112 = sphi 0, %s110
    %s113 = sphi 0, %s112
    %s127 = sphi 0, %s113
    %s131 = sphi 0, %s131
    %s133 = sphi 0, %s131
    %s134 = sphi 0, %s133
    %s148 = sphi 0, %s134
    %s152 = sphi 0, %s152
    %s154 = sphi 0, %s152
    %s155 = sphi 0, %s154
    %s169 = sphi 0, %s155
    %s175 = sphi 0, %s177
    %s178 = sphi 0, %s175
    %s179 = sphi 0, %s178
    %s195 = sphi 0, %s179
  $region4: #{tpu_custom_call.1} parent=0 // loop_header_branch
    %16 = sbr.rel (%p14) target = $region8
  $region5: #{tpu_custom_call.1} parent=0 // loop_body
    %s18 = ssub.s32 %s13, 1
    %s19 = ssub.s32 %s13, 2
    %s20 = sadd.s32 %s13, 1
    %s21 = ssub.s32 %s13, %s20
    %p22 = scmp.eq.s32.totalorder %s21, 0
    %s24 = sadd.s32 %s23, 1
    %s25 = scalar_select %p22, %s23, %s24
    %p28 = pneg %p22
    %p29 = scmp.eq.s32.totalorder %s13, 1
    %p30 = por %p28, %p29
    %p31 = scmp.ne.s32.totalorder %s23, %s26
    %p32 = scmp.eq.s32.totalorder %s13, 0
    %p33 = por %p31, %p32
    %p34 = scmp.ne.s32.totalorder %s23, %s26
    %p35 = scmp.eq.s32.totalorder %s18, 1
    %p36 = por %p34, %p35
    %p37 = scmp.ne.s32.totalorder %s26, %s27
    %p38 = scmp.eq.s32.totalorder %s18, 0
    %p39 = por %p37, %p38
    %p40 = scmp.ne.s32.totalorder %s26, %s27
    %p41 = scmp.eq.s32.totalorder %s19, 1
    %p42 = por %p40, %p41
    %p44 = scmp.ne.s32.totalorder %s27, %s43
    %p45 = scmp.eq.s32.totalorder %s19, 0
    %p46 = por %p44, %p45
    %s48 = sadd.s32 %s47, 1
    %p51 = scmp.eq.s32.totalorder %s13, 1
    %p52 = scmp.ne.s32.totalorder %s47, %s49
    %p53 = scmp.eq.s32.totalorder %s13, 0
    %p54 = por %p52, %p53
    %p55 = scmp.ne.s32.totalorder %s47, %s49
    %p56 = scmp.eq.s32.totalorder %s18, 1
    %p57 = por %p55, %p56
    %p58 = scmp.ne.s32.totalorder %s49, %s50
    %p59 = scmp.eq.s32.totalorder %s18, 0
    %p60 = por %p58, %p59
    %p61 = scmp.ne.s32.totalorder %s49, %s50
    %p62 = scmp.eq.s32.totalorder %s19, 1
    %p63 = por %p61, %p62
    %p65 = scmp.ne.s32.totalorder %s50, %s64
    %p66 = scmp.eq.s32.totalorder %s19, 0
    %p67 = por %p65, %p66
    %s69 = sadd.s32 %s68, 1
    %p72 = scmp.eq.s32.totalorder %s13, 1
    %p73 = scmp.ne.s32.totalorder %s68, %s70
    %p74 = scmp.eq.s32.totalorder %s13, 0
    %p75 = por %p73, %p74
    %p76 = scmp.ne.s32.totalorder %s68, %s70
    %p77 = scmp.eq.s32.totalorder %s18, 1
    %p78 = por %p76, %p77
    %p79 = scmp.ne.s32.totalorder %s70, %s71
    %p80 = scmp.eq.s32.totalorder %s18, 0
    %p81 = por %p79, %p80
    %p82 = scmp.ne.s32.totalorder %s70, %s71
    %p83 = scmp.eq.s32.totalorder %s19, 1
    %p84 = por %p82, %p83
    %p86 = scmp.ne.s32.totalorder %s71, %s85
    %p87 = scmp.eq.s32.totalorder %s19, 0
    %p88 = por %p86, %p87
    %s90 = sadd.s32 %s89, 1
    %p93 = scmp.eq.s32.totalorder %s13, 1
    %p94 = scmp.ne.s32.totalorder %s89, %s91
    %p95 = scmp.eq.s32.totalorder %s13, 0
    %p96 = por %p94, %p95
    %p97 = scmp.ne.s32.totalorder %s89, %s91
    %p98 = scmp.eq.s32.totalorder %s18, 1
    %p99 = por %p97, %p98
    %p100 = scmp.ne.s32.totalorder %s91, %s92
    %p101 = scmp.eq.s32.totalorder %s18, 0
    %p102 = por %p100, %p101
    %p103 = scmp.ne.s32.totalorder %s91, %s92
    %p104 = scmp.eq.s32.totalorder %s19, 1
    %p105 = por %p103, %p104
    %p107 = scmp.ne.s32.totalorder %s92, %s106
    %p108 = scmp.eq.s32.totalorder %s19, 0
    %p109 = por %p107, %p108
    %s111 = sadd.s32 %s110, 1
    %p114 = scmp.eq.s32.totalorder %s13, 1
    %p115 = scmp.ne.s32.totalorder %s110, %s112
    %p116 = scmp.eq.s32.totalorder %s13, 0
    %p117 = por %p115, %p116
    %p118 = scmp.ne.s32.totalorder %s110, %s112
    %p119 = scmp.eq.s32.totalorder %s18, 1
    %p120 = por %p118, %p119
    %p121 = scmp.ne.s32.totalorder %s112, %s113
    %p122 = scmp.eq.s32.totalorder %s18, 0
    %p123 = por %p121, %p122
    %p124 = scmp.ne.s32.totalorder %s112, %s113
    %p125 = scmp.eq.s32.totalorder %s19, 1
    %p126 = por %p124, %p125
    %p128 = scmp.ne.s32.totalorder %s113, %s127
    %p129 = scmp.eq.s32.totalorder %s19, 0
    %p130 = por %p128, %p129
    %s132 = sadd.s32 %s131, 1
    %p135 = scmp.eq.s32.totalorder %s13, 1
    %p136 = scmp.ne.s32.totalorder %s131, %s133
    %p137 = scmp.eq.s32.totalorder %s13, 0
    %p138 = por %p136, %p137
    %p139 = scmp.ne.s32.totalorder %s131, %s133
    %p140 = scmp.eq.s32.totalorder %s18, 1
    %p141 = por %p139, %p140
    %p142 = scmp.ne.s32.totalorder %s133, %s134
    %p143 = scmp.eq.s32.totalorder %s18, 0
    %p144 = por %p142, %p143
    %p145 = scmp.ne.s32.totalorder %s133, %s134
    %p146 = scmp.eq.s32.totalorder %s19, 1
    %p147 = por %p145, %p146
    %p149 = scmp.ne.s32.totalorder %s134, %s148
    %p150 = scmp.eq.s32.totalorder %s19, 0
    %p151 = por %p149, %p150
    %s153 = sadd.s32 %s152, 1
    %p156 = scmp.eq.s32.totalorder %s13, 1
    %p157 = scmp.ne.s32.totalorder %s152, %s154
    %p158 = scmp.eq.s32.totalorder %s13, 0
    %p159 = por %p157, %p158
    %p160 = scmp.ne.s32.totalorder %s152, %s154
    %p161 = scmp.eq.s32.totalorder %s18, 1
    %p162 = por %p160, %p161
    %p163 = scmp.ne.s32.totalorder %s154, %s155
    %p164 = scmp.eq.s32.totalorder %s18, 0
    %p165 = por %p163, %p164
    %p166 = scmp.ne.s32.totalorder %s154, %s155
    %p167 = scmp.eq.s32.totalorder %s19, 1
    %p168 = por %p166, %p167
    %p170 = scmp.ne.s32.totalorder %s155, %s169
    %p171 = scmp.eq.s32.totalorder %s19, 0
    %p172 = por %p170, %p171
    %s173 = ssub.s32 %s13, %s20
    %p174 = scmp.eq.s32.totalorder %s173, 0
    %s176 = sadd.s32 %s175, 1
    %s177 = scalar_select %p174, %s175, %s176
    %p180 = pneg %p174
    %p181 = scmp.eq.s32.totalorder %s13, 1
    %p182 = por %p180, %p181
    %p183 = scmp.ne.s32.totalorder %s175, %s178
    %p184 = scmp.eq.s32.totalorder %s13, 0
    %p185 = por %p183, %p184
    %p186 = scmp.ne.s32.totalorder %s175, %s178
    %p187 = scmp.eq.s32.totalorder %s18, 1
    %p188 = por %p186, %p187
    %p189 = scmp.ne.s32.totalorder %s178, %s179
    %p190 = scmp.eq.s32.totalorder %s18, 0
    %p191 = por %p189, %p190
    %p192 = scmp.ne.s32.totalorder %s178, %s179
    %p193 = scmp.eq.s32.totalorder %s19, 1
    %p194 = por %p192, %p193
    %p196 = scmp.ne.s32.totalorder %s179, %s195
    %p197 = scmp.eq.s32.totalorder %s19, 0
    %p198 = por %p196, %p197
    %p199 = scmp.le.s32.totalorder 1, %s13
    %p200 = scmp.lt.s32.totalorder %s13, 3
    %p201 = pnand %p199, %p200
    %p202 = pneg %p201
    // Predicated region
    $region9: #{tpu_custom_call.1} parent=5 // pred_check
      _
    $region10: #{tpu_custom_call.1} parent=5 // pred_check_branch
      %204 = sbr.rel (%p201) target = $region12
    $region11: #{tpu_custom_call.1} parent=5 // pred_region
      %s205 = ssub.s32 %s13, 1
      // Predicated region
      $region13: #{tpu_custom_call.1} parent=11 // pred_check
        %p206 = pneg %p60
      $region14: #{tpu_custom_call.1} parent=11 // pred_check_branch
        %208 = sbr.rel (%p206) target = $region16
      $region15: #{tpu_custom_call.1} parent=11 // pred_region
        _
      $region16: #{tpu_custom_call.1} parent=11 // pred_fallthru
        _
      // Predicated region
      $region17: #{tpu_custom_call.1} parent=11 // pred_check
        %p209 = pneg %p81
      $region18: #{tpu_custom_call.1} parent=11 // pred_check_branch
        %211 = sbr.rel (%p209) target = $region20
      $region19: #{tpu_custom_call.1} parent=11 // pred_region
        _
      $region20: #{tpu_custom_call.1} parent=11 // pred_fallthru
        _
      // Predicated region
      $region21: #{tpu_custom_call.1} parent=11 // pred_check
        %p212 = pneg %p102
      $region22: #{tpu_custom_call.1} parent=11 // pred_check_branch
        %214 = sbr.rel (%p212) target = $region24
      $region23: #{tpu_custom_call.1} parent=11 // pred_region
        _
      $region24: #{tpu_custom_call.1} parent=11 // pred_fallthru
        _
      // Predicated region
      $region25: #{tpu_custom_call.1} parent=11 // pred_check
        %p215 = pneg %p123
      $region26: #{tpu_custom_call.1} parent=11 // pred_check_branch
        %217 = sbr.rel (%p215) target = $region28
      $region27: #{tpu_custom_call.1} parent=11 // pred_region
        _
      $region28: #{tpu_custom_call.1} parent=11 // pred_fallthru
        _
      // Predicated region
      $region29: #{tpu_custom_call.1} parent=11 // pred_check
        %p218 = pneg %p144
      $region30: #{tpu_custom_call.1} parent=11 // pred_check_branch
        %220 = sbr.rel (%p218) target = $region32
      $region31: #{tpu_custom_call.1} parent=11 // pred_region
        _
      $region32: #{tpu_custom_call.1} parent=11 // pred_fallthru
        _
      // Predicated region
      $region33: #{tpu_custom_call.1} parent=11 // pred_check
        %p221 = pneg %p165
      $region34: #{tpu_custom_call.1} parent=11 // pred_check_branch
        %223 = sbr.rel (%p221) target = $region36
      $region35: #{tpu_custom_call.1} parent=11 // pred_region
        _
      $region36: #{tpu_custom_call.1} parent=11 // pred_fallthru
        _
    $region12: #{tpu_custom_call.1} parent=5 // pred_fallthru
      _
    %p224 = scmp.lt.s32.totalorder %s13, 2
    // Predicated region
    $region37: #{tpu_custom_call.1} parent=5 // pred_check
      %p225 = pneg %p224
    $region38: #{tpu_custom_call.1} parent=5 // pred_check_branch
      %227 = sbr.rel (%p225) target = $region40
    $region39: #{tpu_custom_call.1} parent=5 // pred_region
      // Predicated region
      $region41: #{tpu_custom_call.1} parent=39 // pred_check
        %p228 = pneg %p33
      $region42: #{tpu_custom_call.1} parent=39 // pred_check_branch
        %230 = sbr.rel (%p228) target = $region44
      $region43: #{tpu_custom_call.1} parent=39 // pred_region
        %p231 = scmp.lt.s32.totalorder %s13, 1
        %s232 = scalar_select %p231, %s13, 1
        %s233 = smul.addr %s232, 8
        %s234 = scalar_lea.vmem %s0, %s233
      $region44: #{tpu_custom_call.1} parent=39 // pred_fallthru
        _
    $region40: #{tpu_custom_call.1} parent=5 // pred_fallthru
      _
    %p235 = scmp.le.s32.totalorder 1, %s13
    %p236 = scmp.lt.s32.totalorder %s13, 3
    %p237 = pnand %p235, %p236
    %p238 = pneg %p237
    // Predicated region
    $region45: #{tpu_custom_call.1} parent=5 // pred_check
      _
    $region46: #{tpu_custom_call.1} parent=5 // pred_check_branch
      %240 = sbr.rel (%p237) target = $region48
    $region47: #{tpu_custom_call.1} parent=5 // pred_region
      %s241 = ssub.s32 %s13, 1
      %p242 = scmp.lt.s32.totalorder %s18, 1
      %s243 = scalar_select %p242, %s18, 1
      %s244 = smul.addr %s243, 8
      %s245 = scalar_lea.vmem %s0, %s244
      %p246 = pneg %p39
      %p247 = pneg %p36
      %p248 = pneg %p60
      %p249 = pneg %p57
      %p250 = pneg %p81
      %p251 = pneg %p78
      %p252 = pneg %p102
      %p253 = pneg %p99
      %p254 = pneg %p123
      %p255 = pneg %p120
      %p256 = pneg %p144
      %p257 = pneg %p141
      %p258 = pneg %p165
      %p259 = pneg %p162
      %p260 = pneg %p191
      %p261 = pneg %p188
      %p262 = scmp.lt.s32.totalorder %s18, 1
      %s263 = scalar_select %p262, %s18, 1
      %s264 = smul.addr %s263, 8
      %s265 = scalar_lea.vmem %s7, %s264
      %p266 = scmp.lt.s32.totalorder %s18, 1
      %s267 = scalar_select %p266, %s18, 1
      %s268 = smul.addr %s267, 8
      %s269 = scalar_lea.vmem %s0, %s268
      %p270 = scmp.lt.s32.totalorder %s18, 1
      %s271 = scalar_select %p270, %s18, 1
      %s272 = smul.addr %s271, 8
      %s273 = scalar_lea.vmem %s7, %s272
      %v274 = vld [vmem:[%s269] sm:$0xff]
      %v275 = vld [vmem:[%s1] sm:$0xff]
      %v276 = vld [vmem:[%s2] sm:$0x1]
      %v278 = vlaneseq
      %v279 = vshrl.u32 %v278, 7
      %v280 = vsub.s32 0, %v279
      %v281 = vrot.slane %v276, %v280
      %vm283 = vcmask 64512
      %v285 = vsel %vm283, %v274, 0
      %287 = vmatprep.subr.mxu0 0.0
      %288 = vmatpush1.msra.mxu0 %v275
      %289 = vmatprep.subr.mxu0 0.0
      %290 = vmatpush1.msra.mxu0 0.0
      %291 = vmatprep.subr.mxu0 0.0
      %292 = vmatpush1.msra.mxu0 0.0
      %293 = vmatprep.subr.mxu0 0.0
      %294 = vmatpush1.msra.mxu0 0.0
      %295 = vmatprep.subr.mxu0 0.0
      %296 = vmatpush1.msra.mxu0 0.0
      %297 = vmatprep.subr.mxu0 0.0
      %298 = vmatpush1.msra.mxu0 0.0
      %299 = vmatprep.subr.mxu0 0.0
      %300 = vmatpush1.msra.mxu0 0.0
      %301 = vmatprep.subr.mxu0 0.0
      %302 = vmatpush1.msra.mxu0 0.0
      %303 = vmatprep.subr.mxu0 0.0
      %304 = vmatpush1.msra.mxu0 0.0
      %305 = vmatprep.subr.mxu0 0.0
      %306 = vmatpush1.msra.mxu0 0.0
      %307 = vmatprep.subr.mxu0 0.0
      %308 = vmatpush1.msra.mxu0 0.0
      %309 = vmatprep.subr.mxu0 0.0
      %310 = vmatpush1.msra.mxu0 0.0
      %311 = vmatprep.subr.mxu0 0.0
      %312 = vmatpush1.msra.mxu0 0.0
      %313 = vmatprep.subr.mxu0 0.0
      %314 = vmatpush1.msra.mxu0 0.0
      %315 = vmatprep.subr.mxu0 0.0
      %316 = vmatpush1.msra.mxu0 0.0
      %317 = vmatprep.subr.mxu0 0.0
      %318 = vmatpush1.msra.mxu0 0.0
      %319 = vmatprep.subr.mxu0 0.0
      %320 = vmatpush1.msra.mxu0 0.0
      %321 = vmatprep.subr.mxu0 0.0
      %322 = vmatpush1.msra.mxu0 0.0
      %323 = vmatprep.subr.mxu0 0.0
      %324 = vmatpush1.msra.mxu0 0.0
      %325 = vmatprep.subr.mxu0 0.0
      %326 = vmatpush1.msra.mxu0 0.0
      %327 = vmatprep.subr.mxu0 0.0
      %328 = vmatpush1.msra.mxu0 0.0
      %329 = vmatprep.subr.mxu0 0.0
      %330 = vmatpush1.msra.mxu0 0.0
      %331 = vmatprep.subr.mxu0 0.0
      %332 = vmatpush1.msra.mxu0 0.0
      %333 = vmatprep.subr.mxu0 0.0
      %334 = vmatpush1.msra.mxu0 0.0
      %335 = vmatprep.subr.mxu0 0.0
      %336 = vmatpush1.msra.mxu0 0.0
      %337 = vmatprep.subr.mxu0 0.0
      %338 = vmatpush1.msra.mxu0 0.0
      %339 = vmatprep.subr.mxu0 0.0
      %340 = vmatpush1.msra.mxu0 0.0
      %341 = vmatprep.subr.mxu0 0.0
      %342 = vmatpush1.msra.mxu0 0.0
      %343 = vmatprep.subr.mxu0 0.0
      %344 = vmatpush1.msra.mxu0 0.0
      %345 = vmatprep.subr.mxu0 0.0
      %346 = vmatpush1.msra.mxu0 0.0
      %347 = vmatprep.subr.mxu0 0.0
      %348 = vmatpush1.msra.mxu0 0.0
      %349 = vmatprep.subr.mxu0 0.0
      %350 = vmatpush1.msra.mxu0 0.0
      %351 = vmatprep.mubr.f32.mxu0 0.0
      %352 = vmatmul.mubr.f32.gmra.mrb[0].mxu0 %v285
      %v353 = vpop.f32.mrb[0].mxu0
      %v354 = vadd.f32 %v281, %v353
      %v355 = vpop.f32.mrb[0].mxu0
      %356 = vdwg.mxu0
      %v357 = vmax.f32 %v354, 0.0
      %v358 = vld [vmem:[%s3] sm:$0xff]
      %v359 = vld [vmem:[%s3 + $0x8] sm:$0xff]
      %v360 = vld [vmem:[%s3 + $0x10] sm:$0xff]
      %v361 = vld [vmem:[%s3 + $0x18] sm:$0xff]
      %v362 = vld [vmem:[%s4] sm:$0x1]
      %v364 = vlaneseq
      %v365 = vshrl.u32 %v364, 7
      %v366 = vsub.s32 0, %v365
      %v367 = vrot.slane %v362, %v366
      %vm369 = vcmask 261120
      %v371 = vsel %vm369, %v357, 0
      %373 = vmatprep.subr.mxu0 0.0
      %374 = vmatpush1.msra.mxu0 %v358
      %375 = vmatprep.subr.mxu0 0.0
      %376 = vmatpush1.msra.mxu0 %v359
      %377 = vmatprep.subr.mxu0 0.0
      %378 = vmatpush1.msra.mxu0 %v360
      %379 = vmatprep.subr.mxu0 0.0
      %380 = vmatpush1.msra.mxu0 %v361
      %381 = vmatprep.subr.mxu0 0.0
      %382 = vmatpush1.msra.mxu0 0.0
      %383 = vmatprep.subr.mxu0 0.0
      %384 = vmatpush1.msra.mxu0 0.0
      %385 = vmatprep.subr.mxu0 0.0
      %386 = vmatpush1.msra.mxu0 0.0
      %387 = vmatprep.subr.mxu0 0.0
      %388 = vmatpush1.msra.mxu0 0.0
      %389 = vmatprep.subr.mxu0 0.0
      %390 = vmatpush1.msra.mxu0 0.0
      %391 = vmatprep.subr.mxu0 0.0
      %392 = vmatpush1.msra.mxu0 0.0
      %393 = vmatprep.subr.mxu0 0.0
      %394 = vmatpush1.msra.mxu0 0.0
      %395 = vmatprep.subr.mxu0 0.0
      %396 = vmatpush1.msra.mxu0 0.0
      %397 = vmatprep.subr.mxu0 0.0
      %398 = vmatpush1.msra.mxu0 0.0
      %399 = vmatprep.subr.mxu0 0.0
      %400 = vmatpush1.msra.mxu0 0.0
      %401 = vmatprep.subr.mxu0 0.0
      %402 = vmatpush1.msra.mxu0 0.0
      %403 = vmatprep.subr.mxu0 0.0
      %404 = vmatpush1.msra.mxu0 0.0
      %405 = vmatprep.subr.mxu0 0.0
      %406 = vmatpush1.msra.mxu0 0.0
      %407 = vmatprep.subr.mxu0 0.0
      %408 = vmatpush1.msra.mxu0 0.0
      %409 = vmatprep.subr.mxu0 0.0
      %410 = vmatpush1.msra.mxu0 0.0
      %411 = vmatprep.subr.mxu0 0.0
      %412 = vmatpush1.msra.mxu0 0.0
      %413 = vmatprep.subr.mxu0 0.0
      %414 = vmatpush1.msra.mxu0 0.0
      %415 = vmatprep.subr.mxu0 0.0
      %416 = vmatpush1.msra.mxu0 0.0
      %417 = vmatprep.subr.mxu0 0.0
      %418 = vmatpush1.msra.mxu0 0.0
      %419 = vmatprep.subr.mxu0 0.0
      %420 = vmatpush1.msra.mxu0 0.0
      %421 = vmatprep.subr.mxu0 0.0
      %422 = vmatpush1.msra.mxu0 0.0
      %423 = vmatprep.subr.mxu0 0.0
      %424 = vmatpush1.msra.mxu0 0.0
      %425 = vmatprep.subr.mxu0 0.0
      %426 = vmatpush1.msra.mxu0 0.0
      %427 = vmatprep.subr.mxu0 0.0
      %428 = vmatpush1.msra.mxu0 0.0
      %429 = vmatprep.subr.mxu0 0.0
      %430 = vmatpush1.msra.mxu0 0.0
      %431 = vmatprep.subr.mxu0 0.0
      %432 = vmatpush1.msra.mxu0 0.0
      %433 = vmatprep.subr.mxu0 0.0
      %434 = vmatpush1.msra.mxu0 0.0
      %435 = vmatprep.subr.mxu0 0.0
      %436 = vmatpush1.msra.mxu0 0.0
      %437 = vmatprep.mubr.f32.mxu0 0.0
      %438 = vmatmul.mubr.f32.gmra.mrb[0].mxu0 %v371
      %v439 = vpop.f32.mrb[0].mxu0
      %v440 = vadd.f32 %v367, %v439
      %v441 = vpop.f32.mrb[0].mxu0
      %442 = vdwg.mxu0
      %v443 = vmax.f32 %v440, 0.0
      %v444 = vld [vmem:[%s5] sm:$0xff]
      %v445 = vld [vmem:[%s5 + $0x8] sm:$0xff]
      %v446 = vld [vmem:[%s5 + $0x10] sm:$0xff]
      %v447 = vld [vmem:[%s5 + $0x18] sm:$0xff]
      %v448 = vld [vmem:[%s6] sm:$0x1]
      %v450 = vlaneseq
      %v451 = vshrl.u32 %v450, 7
      %v452 = vsub.s32 0, %v451
      %v453 = vrot.slane %v448, %v452
      %v456 = vsel %vm369, %v443, 0
      %458 = vmatprep.subr.mxu0 0.0
      %459 = vmatpush1.msra.mxu0 %v444
      %460 = vmatprep.subr.mxu0 0.0
      %461 = vmatpush1.msra.mxu0 %v445
      %462 = vmatprep.subr.mxu0 0.0
      %463 = vmatpush1.msra.mxu0 %v446
      %464 = vmatprep.subr.mxu0 0.0
      %465 = vmatpush1.msra.mxu0 %v447
      %466 = vmatprep.subr.mxu0 0.0
      %467 = vmatpush1.msra.mxu0 0.0
      %468 = vmatprep.subr.mxu0 0.0
      %469 = vmatpush1.msra.mxu0 0.0
      %470 = vmatprep.subr.mxu0 0.0
      %471 = vmatpush1.msra.mxu0 0.0
      %472 = vmatprep.subr.mxu0 0.0
      %473 = vmatpush1.msra.mxu0 0.0
      %474 = vmatprep.subr.mxu0 0.0
      %475 = vmatpush1.msra.mxu0 0.0
      %476 = vmatprep.subr.mxu0 0.0
      %477 = vmatpush1.msra.mxu0 0.0
      %478 = vmatprep.subr.mxu0 0.0
      %479 = vmatpush1.msra.mxu0 0.0
      %480 = vmatprep.subr.mxu0 0.0
      %481 = vmatpush1.msra.mxu0 0.0
      %482 = vmatprep.subr.mxu0 0.0
      %483 = vmatpush1.msra.mxu0 0.0
      %484 = vmatprep.subr.mxu0 0.0
      %485 = vmatpush1.msra.mxu0 0.0
      %486 = vmatprep.subr.mxu0 0.0
      %487 = vmatpush1.msra.mxu0 0.0
      %488 = vmatprep.subr.mxu0 0.0
      %489 = vmatpush1.msra.mxu0 0.0
      %490 = vmatprep.subr.mxu0 0.0
      %491 = vmatpush1.msra.mxu0 0.0
      %492 = vmatprep.subr.mxu0 0.0
      %493 = vmatpush1.msra.mxu0 0.0
      %494 = vmatprep.subr.mxu0 0.0
      %495 = vmatpush1.msra.mxu0 0.0
      %496 = vmatprep.subr.mxu0 0.0
      %497 = vmatpush1.msra.mxu0 0.0
      %498 = vmatprep.subr.mxu0 0.0
      %499 = vmatpush1.msra.mxu0 0.0
      %500 = vmatprep.subr.mxu0 0.0
      %501 = vmatpush1.msra.mxu0 0.0
      %502 = vmatprep.subr.mxu0 0.0
      %503 = vmatpush1.msra.mxu0 0.0
      %504 = vmatprep.subr.mxu0 0.0
      %505 = vmatpush1.msra.mxu0 0.0
      %506 = vmatprep.subr.mxu0 0.0
      %507 = vmatpush1.msra.mxu0 0.0
      %508 = vmatprep.subr.mxu0 0.0
      %509 = vmatpush1.msra.mxu0 0.0
      %510 = vmatprep.subr.mxu0 0.0
      %511 = vmatpush1.msra.mxu0 0.0
      %512 = vmatprep.subr.mxu0 0.0
      %513 = vmatpush1.msra.mxu0 0.0
      %514 = vmatprep.subr.mxu0 0.0
      %515 = vmatpush1.msra.mxu0 0.0
      %516 = vmatprep.subr.mxu0 0.0
      %517 = vmatpush1.msra.mxu0 0.0
      %518 = vmatprep.subr.mxu0 0.0
      %519 = vmatpush1.msra.mxu0 0.0
      %520 = vmatprep.subr.mxu0 0.0
      %521 = vmatpush1.msra.mxu0 0.0
      %522 = vmatprep.mubr.f32.mxu0 0.0
      %523 = vmatmul.mubr.f32.gmra.mrb[0].mxu0 %v456
      %v524 = vpop.f32.mrb[0].mxu0
      %v525 = vadd.f32 %v453, %v524
      %v526 = vpop.f32.mrb[0].mxu0
      %527 = vdwg.mxu0
      %v528 = vlaneseq
      %v529 = vand.u32 %v528, 127
      %v530 = vmax.f32 %v525, -20.0
      %v531 = vmin.f32 %v530, 2.0
      %v532 = vmul.f32 %v531, 1.442695
      %v533 = vpow.pop %v532
      %vm534 = vcmp.lt.s32.totalorder %v529, 4
      %v535 = vsel %vm534, %v525, %v533
      %536 = vst.msk [vmem:[%s273] sm:$0xff] %vm283, %v535
      %p537 = scmp.lt.s32.totalorder %s18, 1
      %s538 = scalar_select %p537, %s18, 1
      %s539 = smul.addr %s538, 8
      %s540 = scalar_lea.vmem %s7, %s539
      // Predicated region
      $region49: #{tpu_custom_call.1} parent=47 // pred_check
        %p541 = pneg %p188
      $region50: #{tpu_custom_call.1} parent=47 // pred_check_branch
        %543 = sbr.rel (%p541) target = $region52
      $region51: #{tpu_custom_call.1} parent=47 // pred_region
        _
      $region52: #{tpu_custom_call.1} parent=47 // pred_fallthru
        _
    $region48: #{tpu_custom_call.1} parent=5 // pred_fallthru
      _
    %p544 = scmp.le.s32.totalorder 2, %s13
    // Predicated region
    $region53: #{tpu_custom_call.1} parent=5 // pred_check
      %p545 = pneg %p544
    $region54: #{tpu_custom_call.1} parent=5 // pred_check_branch
      %547 = sbr.rel (%p545) target = $region56
    $region55: #{tpu_custom_call.1} parent=5 // pred_region
      %s548 = ssub.s32 %s13, 2
      // Predicated region
      $region57: #{tpu_custom_call.1} parent=55 // pred_check
        %p549 = pneg %p194
      $region58: #{tpu_custom_call.1} parent=55 // pred_check_branch
        %551 = sbr.rel (%p549) target = $region60
      $region59: #{tpu_custom_call.1} parent=55 // pred_region
        %p552 = scmp.lt.s32.totalorder %s19, 1
        %s553 = scalar_select %p552, %s19, 1
        %s554 = smul.addr %s553, 8
        %s555 = scalar_lea.vmem %s7, %s554
      $region60: #{tpu_custom_call.1} parent=55 // pred_fallthru
        _
    $region56: #{tpu_custom_call.1} parent=5 // pred_fallthru
      _
  $region6: #{tpu_custom_call.1} parent=0 // loop_footer
    %s17 = sadd.s32 1, %s13
  $region7: #{tpu_custom_call.1} parent=0 // loop_footer_branch
    %12 = sbr.rel target = $region3
  $region8: #{tpu_custom_call.1} parent=0 // loop_exit
    _

</llo_original>
